<compile_context>
chip_gen: v7x
topology: tpu7x:2x2x1
jax: 0.10.0
libtpu: 0.0.40
codegen_flags: <defaults>
</compile_context>

<pallas_src>
import functools

import jax
import jax.numpy as jnp
from jax.experimental import pallas as pl
from jax.experimental.pallas import tpu as pltpu

_LANES = 128


# ----------------------------------------------------------------------------
# Tiling helpers
# ----------------------------------------------------------------------------
def _choose_tile_rows(rows, width, dtype):
    """Pick a large, dtype-aware row tile (~2 MiB blocks), keeping >=2 steps."""
    sub = 16 if jnp.dtype(dtype) == jnp.dtype(jnp.bfloat16) else 8
    itemsize = jnp.dtype(dtype).itemsize
    target_block_bytes = 2 * 1024 * 1024  # ~2 MiB streaming blocks
    tile = max(sub, target_block_bytes // max(1, width * itemsize))
    tile = min(tile, 4096)
    tile = max(sub, (tile // sub) * sub)
    # Keep the parallel grid axis populated (v7x megacore: 2 TCs/chip).
    while tile > sub and pl.cdiv(rows, tile) < 2:
        tile = max(sub, ((tile // 2) // sub) * sub)
    return tile


def _vmem_budget_bytes(tile, width, dtype):
    """Scoped-VMEM request: double-buffered in/out blocks + f32 temps."""
    itemsize = jnp.dtype(dtype).itemsize
    block = tile * width
    need = 2 * block * itemsize          # input, double-buffered
    need += 2 * block * itemsize         # output, double-buffered
    need += 4 * block * 4                # in-kernel f32 temporaries
    need += 2 * 1024 * 1024              # slack
    # Clamp: at least the usual default, at most 48 MiB (v7x headroom < 64 MiB)
    return int(min(max(need, 16 * 1024 * 1024), 48 * 1024 * 1024))


# ----------------------------------------------------------------------------
# Kernels
# ----------------------------------------------------------------------------
def _ln_rows_kernel(x_ref, alpha_ref, bias_ref, o_ref, *, eps, d):
    """Generic path: one normalization group per row (lane axis = D)."""
    x = x_ref[...].astype(jnp.float32)
    mean = jnp.mean(x, axis=-1, keepdims=True)
    diff = x - mean
    # torch.std default is the unbiased estimator (divide by N - 1).
    var = jnp.sum(diff * diff, axis=-1, keepdims=True) * (1.0 / (d - 1))
    std = jnp.sqrt(var)
    inv = pl.reciprocal(std + eps, approx=False)      # (tile, 1), broadcast mul
    y = alpha_ref[0] * (diff * inv) + bias_ref[0]
    o_ref[...] = y.astype(o_ref.dtype)


def _ln_folded_kernel(x_ref, seg_ref, alpha_ref, bias_ref, o_ref, *, eps, d):
    """Lane-dense path for small D: k = 128 // D groups live in one 128-lane
    row; segment sums are broadcast back per lane via a block-diagonal matmul
    on the MXU (essentially free -- the kernel is memory bound)."""
    x = x_ref[...].astype(jnp.float32)                # (tile, 128)
    seg = seg_ref[...]                                # (128, 128) block-diag 1s
    seg_sum = jnp.dot(x, seg,
                      preferred_element_type=jnp.float32,
                      precision=jax.lax.Precision.HIGHEST)
    mean = seg_sum * (1.0 / d)
    diff = x - mean
    sq_sum = jnp.dot(diff * diff, seg,
                     preferred_element_type=jnp.float32,
                     precision=jax.lax.Precision.HIGHEST)
    var = sq_sum * (1.0 / (d - 1))
    std = jnp.sqrt(var)
    inv = pl.reciprocal(std + eps, approx=False)
    y = alpha_ref[0] * (diff * inv) + bias_ref[0]
    o_ref[...] = y.astype(o_ref.dtype)


# ----------------------------------------------------------------------------
# Wrappers
# ----------------------------------------------------------------------------
def _ln_rows(x2, alpha, bias, eps, d):
    rows, D = x2.shape
    tile = _choose_tile_rows(rows, D, x2.dtype)
    grid = (pl.cdiv(rows, tile),)
    return pl.pallas_call(
        functools.partial(_ln_rows_kernel, eps=eps, d=d),
        out_shape=jax.ShapeDtypeStruct((rows, D), x2.dtype),
        grid=grid,
        in_specs=[
            pl.BlockSpec((tile, D), lambda i: (i, 0)),
            pl.BlockSpec(memory_space=pltpu.MemorySpace.SMEM),
            pl.BlockSpec(memory_space=pltpu.MemorySpace.SMEM),
        ],
        out_specs=pl.BlockSpec((tile, D), lambda i: (i, 0)),
        compiler_params=pltpu.CompilerParams(
            dimension_semantics=("parallel",),
            vmem_limit_bytes=_vmem_budget_bytes(tile, D, x2.dtype),
        ),
    )(x2, alpha, bias)


def _ln_folded(x2, alpha, bias, eps, d, k):
    rows, D = x2.shape
    width = k * D                          # == 128 (lane-dense)
    folded_rows = rows // k
    xf = x2.reshape(folded_rows, width)    # pure reshape, row-major fold

    # Block-diagonal segment matrix: S[i, j] = 1 iff i and j are in the same
    # D-wide group.  (x @ S) broadcasts each group's sum across its lanes.
    ii = jax.lax.broadcasted_iota(jnp.int32, (width, width), 0) // d
    jj = jax.lax.broadcasted_iota(jnp.int32, (width, width), 1) // d
    seg = (ii == jj).astype(jnp.float32)

    tile = _choose_tile_rows(folded_rows, width, x2.dtype)
    grid = (pl.cdiv(folded_rows, tile),)
    out = pl.pallas_call(
        functools.partial(_ln_folded_kernel, eps=eps, d=d),
        out_shape=jax.ShapeDtypeStruct((folded_rows, width), x2.dtype),
        grid=grid,
        in_specs=[
            pl.BlockSpec((tile, width), lambda i: (i, 0)),
            pl.BlockSpec((width, width), lambda i: (0, 0)),
            pl.BlockSpec(memory_space=pltpu.MemorySpace.SMEM),
            pl.BlockSpec(memory_space=pltpu.MemorySpace.SMEM),
        ],
        out_specs=pl.BlockSpec((tile, width), lambda i: (i, 0)),
        compiler_params=pltpu.CompilerParams(
            dimension_semantics=("parallel",),
            vmem_limit_bytes=_vmem_budget_bytes(tile, width, x2.dtype),
        ),
    )(xf, seg, alpha, bias)
    return out.reshape(rows, D)


def layer_normalization(x, alpha, bias, eps=1e-6):
    """x: (B, S, D).  alpha, bias: shape (1,) float32 scalars.

    Matches the reference LayerNormalization: unbiased std (N-1), eps added
    to std (not variance), scalar affine parameters.
    """
    B, S, D = x.shape
    rows = B * S
    x2 = x.reshape(rows, D)

    if D < _LANES and _LANES % D == 0 and rows % (_LANES // D) == 0:
        out = _ln_folded(x2, alpha, bias, eps, D, _LANES // D)
    else:
        out = _ln_rows(x2, alpha, bias, eps, D)
    return out.reshape(B, S, D)


def encoder_forward(x, src_mask, params, layer_fns=()):
    """Mirrors Encoder.forward: apply each layer, then LayerNormalization."""
    for layer_fn in layer_fns:
        x = layer_fn(x, src_mask)
    return layer_normalization(x, params["ln_alpha"], params["ln_bias"])


# Jitted entry point (layer_fns bound statically) so the fold-reshape and the
# segment-matrix construction fuse with the pallas_call instead of dispatching
# as separate eager XLA ops.
encoder_forward_jit = jax.jit(functools.partial(encoder_forward, layer_fns=()))


# ----------------------------------------------------------------------------
# Demo / correctness check
# ----------------------------------------------------------------------------
def _ref_layer_norm(x, alpha, bias, eps=1e-6):
    mean = jnp.mean(x, axis=-1, keepdims=True)
    std = jnp.std(x, axis=-1, keepdims=True, ddof=1)   # unbiased, like torch.std
    return alpha * (x - mean) / (std + eps) + bias


if __name__ == "__main__":
    key = jax.random.PRNGKey(0)
    k1, k2 = jax.random.split(key)

    # Deterministic params matching LayerNormalization.__init__:
    params = {
        "ln_alpha": jnp.ones((1,), dtype=jnp.float32),
        "ln_bias": jnp.zeros((1,), dtype=jnp.float32),
    }

    # Case 1: small encoder shape (exercises the lane-dense folded path, D=32).
    B, S, D = 2, 8, 32
    x = jax.random.normal(k1, (B, S, D), dtype=jnp.float32)
    src_mask = jnp.ones((B, 1, 1, S), dtype=jnp.float32)  # consumed by layers only
    out = encoder_forward_jit(x, src_mask, params)
    out = jax.block_until_ready(out)
    ref = _ref_layer_norm(x, params["ln_alpha"], params["ln_bias"])
    assert out.shape == (B, S, D)
    assert jnp.max(jnp.abs(out - ref)) < 1e-4

    # Case 2: larger d_model (exercises the generic lane-dense row path).
    B2, S2, D2 = 2, 64, 256
    x2 = jax.random.normal(k2, (B2, S2, D2), dtype=jnp.float32)
    src_mask2 = jnp.ones((B2, 1, 1, S2), dtype=jnp.float32)
    out2 = encoder_forward_jit(x2, src_mask2, params)
    out2 = jax.block_until_ready(out2)
    ref2 = _ref_layer_norm(x2, params["ln_alpha"], params["ln_bias"])
    assert out2.shape == (B2, S2, D2)
    assert jnp.max(jnp.abs(out2 - ref2)) < 1e-4

    print("KERNEL_OK")
</pallas_src>

<mosaic_0001>
module attributes {stable_mosaic.version = 11 : i64} {
  func.func @_ln_folded_kernel(%arg0: i32, %arg1: memref<8x128xf32, #tpu.memory_space<vmem>>, %arg2: memref<128x128xf32, #tpu.memory_space<vmem>>, %arg3: memref<1xf32, #tpu.memory_space<smem>>, %arg4: memref<1xf32, #tpu.memory_space<smem>>, %arg5: memref<8x128xf32, #tpu.memory_space<vmem>>) attributes {dimension_semantics = [#tpu.dimension_semantics<parallel>], iteration_bounds = array<i64: 1>, scalar_prefetch = 0 : i64, scratch_operands = 0 : i64, tpu.core_type = #tpu.core_type<tc>, window_params = [{transform_indices = @transform_0, window_bounds = array<i64: 8, 128>}, {pipeline_mode = #tpu.pipeline_mode<synchronous>, transform_indices = @transform_1, window_bounds = array<i64: 128, 128>}, {transform_indices = @transform_2, window_bounds = array<i64: 1>}, {transform_indices = @transform_3, window_bounds = array<i64: 1>}, {transform_indices = @transform_4, window_bounds = array<i64: 8, 128>}]} {
    %c0 = arith.constant 0 : index
    %c0_0 = arith.constant 0 : index
    %0 = vector.load %arg1[%c0, %c0_0] : memref<8x128xf32, #tpu.memory_space<vmem>>, vector<8x128xf32>
    %c0_1 = arith.constant 0 : index
    %c0_2 = arith.constant 0 : index
    %1 = vector.load %arg2[%c0_1, %c0_2] : memref<128x128xf32, #tpu.memory_space<vmem>>, vector<128x128xf32>
    %cst = arith.constant dense<0.000000e+00> : vector<8x128xf32>
    %2 = tpu.matmul %0, %1, %cst {dimension_numbers = #tpu.dot_dimension_numbers<[1], [0], [0], [1], [0, 0, 1, 1], [], []>, precision = #tpu.contract_precision<fp32>} : vector<8x128xf32>, vector<128x128xf32>, vector<8x128xf32> -> vector<8x128xf32>
    %cst_3 = arith.constant 3.125000e-02 : f32
    %3 = vector.broadcast %cst_3 : f32 to vector<8x128xf32>
    %4 = arith.mulf %2, %3 : vector<8x128xf32>
    %5 = arith.subf %0, %4 : vector<8x128xf32>
    %6 = arith.mulf %5, %5 : vector<8x128xf32>
    %cst_4 = arith.constant dense<0.000000e+00> : vector<8x128xf32>
    %7 = tpu.matmul %6, %1, %cst_4 {dimension_numbers = #tpu.dot_dimension_numbers<[1], [0], [0], [1], [0, 0, 1, 1], [], []>, precision = #tpu.contract_precision<fp32>} : vector<8x128xf32>, vector<128x128xf32>, vector<8x128xf32> -> vector<8x128xf32>
    %cst_5 = arith.constant 0.0322580636 : f32
    %8 = vector.broadcast %cst_5 : f32 to vector<8x128xf32>
    %9 = arith.mulf %7, %8 : vector<8x128xf32>
    %10 = math.sqrt %9 : vector<8x128xf32>
    %cst_6 = arith.constant 9.99999997E-7 : f32
    %11 = vector.broadcast %cst_6 : f32 to vector<8x128xf32>
    %12 = arith.addf %10, %11 : vector<8x128xf32>
    %13 = tpu.reciprocal %12 : vector<8x128xf32> -> vector<8x128xf32>
    %c0_7 = arith.constant 0 : index
    %14 = memref.load %arg3[%c0_7] : memref<1xf32, #tpu.memory_space<smem>>
    %15 = arith.mulf %5, %13 : vector<8x128xf32>
    %16 = vector.broadcast %14 : f32 to vector<8x128xf32>
    %17 = arith.mulf %16, %15 : vector<8x128xf32>
    %c0_8 = arith.constant 0 : index
    %18 = memref.load %arg4[%c0_8] : memref<1xf32, #tpu.memory_space<smem>>
    %19 = vector.broadcast %18 : f32 to vector<8x128xf32>
    %20 = arith.addf %17, %19 : vector<8x128xf32>
    %c0_9 = arith.constant 0 : index
    %c0_10 = arith.constant 0 : index
    %21 = vector.load %arg5[%c0_9, %c0_10] : memref<8x128xf32, #tpu.memory_space<vmem>>, vector<8x128xf32>
    tpu.vector_store %arg5[%c0_9, %c0_10], %20 {strides = array<i32>} : memref<8x128xf32, #tpu.memory_space<vmem>>, vector<8x128xf32>,
    return
  }
  func.func @transform_0(%arg0: i32) -> (i32, i32) {
    %c0_i32 = arith.constant 0 : i32
    %c0_i32_0 = arith.constant 0 : i32
    return %arg0, %c0_i32 : i32, i32
  }
  func.func @transform_1(%arg0: i32) -> (i32, i32) {
    %c0_i32 = arith.constant 0 : i32
    %c0_i32_0 = arith.constant 0 : i32
    %c0_i32_1 = arith.constant 0 : i32
    return %c0_i32, %c0_i32_0 : i32, i32
  }
  func.func @transform_2(%arg0: i32) -> i32 {
    %c0_i32 = arith.constant 0 : i32
    %c0_i32_0 = arith.constant 0 : i32
    return %c0_i32 : i32
  }
  func.func @transform_3(%arg0: i32) -> i32 {
    %c0_i32 = arith.constant 0 : i32
    %c0_i32_0 = arith.constant 0 : i32
    return %c0_i32 : i32
  }
  func.func @transform_4(%arg0: i32) -> (i32, i32) {
    %c0_i32 = arith.constant 0 : i32
    %c0_i32_0 = arith.constant 0 : i32
    return %arg0, %c0_i32 : i32, i32
  }
}

</mosaic_0001>

<llo_original>
// kernel: encoder_forward.1
$region0: #{encoder_forward.1}
  #allocation0 [shape = 'u32[]', space=smem, size = 0x4, offset = 0x4, fixed_abs, tag = 'smem constant byte address 0x4 - core index']
  #allocation1 [shape = 'u32[144,128]{1,0:T(1,128)}', space=vmem, size = 0x12000, scoped, tag = 'internal scratch']
  #allocation2 [shape = 'f32[1]{0:T(128)S(6)}', space=smem, size = 0x200, scoped, tag = 'scoped memory for encoder_forward.1']
  #allocation3 [shape = 'f32[1]{0:T(128)S(6)}', space=smem, size = 0x200, scoped, tag = 'scoped memory for encoder_forward.1']
  %s0 = inlined_call_operand.vmem [shape: f32[4,128], index: 0, kind: input, shape index: {}]
  %s1 = inlined_call_operand.vmem [shape: f32[128,128], index: 1, kind: input, shape index: {}]
  %s2 = inlined_call_operand.<no memory space> [shape: f32[1], index: 2, kind: input, shape index: {}]
  %s3 = inlined_call_operand.<no memory space> [shape: f32[1], index: 3, kind: input, shape index: {}]
  %s4 = inlined_call_operand.vmem [shape: f32[4,128], index: 4, kind: output, shape index: {}]
  %s5 = sld [smem:[#allocation0]]
  $region56: #{encoder_forward.1} parent=0
    _
  %s7 = ssub.s32 1, %s5
  %s8 = scalar_select 0, %s7, %s5
  %9 = sst [smem:[#allocation2]] %s2
  %10 = sst [smem:[#allocation3]] %s3
  $region1: #{encoder_forward.1} parent=0
    #allocation4 [shape = 'u8[4096]{0}', space=vmem, size = 0x1000, scoped, tag = 'output window, operand 0, single buffered']
    // Predicated region
    $region2: #{encoder_forward.1} parent=1 // pred_check
      _
    $region3: #{encoder_forward.1} parent=1 // pred_check_branch
      %12 = sbr.rel (0) target = $region5
    $region4: #{encoder_forward.1} parent=1 // pred_region
      _
    $region5: #{encoder_forward.1} parent=1 // pred_fallthru
      _
    // Predicated region
    $region6: #{encoder_forward.1} parent=1 // pred_check
      _
    $region7: #{encoder_forward.1} parent=1 // pred_check_branch
      %14 = sbr.rel (0) target = $region9
    $region8: #{encoder_forward.1} parent=1 // pred_region
      _
    $region9: #{encoder_forward.1} parent=1 // pred_fallthru
      _
    // Predicated region
    $region10: #{encoder_forward.1} parent=1 // pred_check
      _
    $region11: #{encoder_forward.1} parent=1 // pred_check_branch
      %16 = sbr.rel (0) target = $region13
    $region12: #{encoder_forward.1} parent=1 // pred_region
      _
    $region13: #{encoder_forward.1} parent=1 // pred_fallthru
      _
    // Predicated region
    $region14: #{encoder_forward.1} parent=1 // pred_check
      _
    $region15: #{encoder_forward.1} parent=1 // pred_check_branch
      %18 = sbr.rel (0) target = $region17
    $region16: #{encoder_forward.1} parent=1 // pred_region
      _
    $region17: #{encoder_forward.1} parent=1 // pred_fallthru
      _
    %v19 = vld [vmem:[%s0] sm:$0xff]
    %v20 = vld [vmem:[%s1] sm:$0xff]
    %v21 = vld [vmem:[%s1 + $0x8] sm:$0xff]
    %v22 = vld [vmem:[%s1 + $0x10] sm:$0xff]
    %v23 = vld [vmem:[%s1 + $0x18] sm:$0xff]
    %v24 = vld [vmem:[%s1 + $0x20] sm:$0xff]
    %v25 = vld [vmem:[%s1 + $0x28] sm:$0xff]
    %v26 = vld [vmem:[%s1 + $0x30] sm:$0xff]
    %v27 = vld [vmem:[%s1 + $0x38] sm:$0xff]
    %v28 = vld [vmem:[%s1 + $0x40] sm:$0xff]
    %v29 = vld [vmem:[%s1 + $0x48] sm:$0xff]
    %v30 = vld [vmem:[%s1 + $0x50] sm:$0xff]
    %v31 = vld [vmem:[%s1 + $0x58] sm:$0xff]
    %v32 = vld [vmem:[%s1 + $0x60] sm:$0xff]
    %v33 = vld [vmem:[%s1 + $0x68] sm:$0xff]
    %v34 = vld [vmem:[%s1 + $0x70] sm:$0xff]
    %v35 = vld [vmem:[%s1 + $0x78] sm:$0xff]
    %36 = vmatprep.subr.mxu0 0.0
    %v37 = vand.u32 %v20, 4294901760
    %38 = vmatpush1.msra.mxu0 %v37
    %39 = vmatprep.subr.mxu0 0.0
    %v40 = vand.u32 %v21, 4294901760
    %41 = vmatpush1.msra.mxu0 %v40
    %42 = vmatprep.subr.mxu0 0.0
    %v43 = vand.u32 %v22, 4294901760
    %44 = vmatpush1.msra.mxu0 %v43
    %45 = vmatprep.subr.mxu0 0.0
    %v46 = vand.u32 %v23, 4294901760
    %47 = vmatpush1.msra.mxu0 %v46
    %48 = vmatprep.subr.mxu0 0.0
    %v49 = vand.u32 %v24, 4294901760
    %50 = vmatpush1.msra.mxu0 %v49
    %51 = vmatprep.subr.mxu0 0.0
    %v52 = vand.u32 %v25, 4294901760
    %53 = vmatpush1.msra.mxu0 %v52
    %54 = vmatprep.subr.mxu0 0.0
    %v55 = vand.u32 %v26, 4294901760
    %56 = vmatpush1.msra.mxu0 %v55
    %57 = vmatprep.subr.mxu0 0.0
    %v58 = vand.u32 %v27, 4294901760
    %59 = vmatpush1.msra.mxu0 %v58
    %60 = vmatprep.subr.mxu0 0.0
    %v61 = vand.u32 %v28, 4294901760
    %62 = vmatpush1.msra.mxu0 %v61
    %63 = vmatprep.subr.mxu0 0.0
    %v64 = vand.u32 %v29, 4294901760
    %65 = vmatpush1.msra.mxu0 %v64
    %66 = vmatprep.subr.mxu0 0.0
    %v67 = vand.u32 %v30, 4294901760
    %68 = vmatpush1.msra.mxu0 %v67
    %69 = vmatprep.subr.mxu0 0.0
    %v70 = vand.u32 %v31, 4294901760
    %71 = vmatpush1.msra.mxu0 %v70
    %72 = vmatprep.subr.mxu0 0.0
    %v73 = vand.u32 %v32, 4294901760
    %74 = vmatpush1.msra.mxu0 %v73
    %75 = vmatprep.subr.mxu0 0.0
    %v76 = vand.u32 %v33, 4294901760
    %77 = vmatpush1.msra.mxu0 %v76
    %78 = vmatprep.subr.mxu0 0.0
    %v79 = vand.u32 %v34, 4294901760
    %80 = vmatpush1.msra.mxu0 %v79
    %81 = vmatprep.subr.mxu0 0.0
    %v82 = vand.u32 %v35, 4294901760
    %83 = vmatpush1.msra.mxu0 %v82
    %84 = vmatprep.subr.mxu0 0.0
    %85 = vmatpush1.msra.mxu0 0.0
    %86 = vmatprep.subr.mxu0 0.0
    %87 = vmatpush1.msra.mxu0 0.0
    %88 = vmatprep.subr.mxu0 0.0
    %89 = vmatpush1.msra.mxu0 0.0
    %90 = vmatprep.subr.mxu0 0.0
    %91 = vmatpush1.msra.mxu0 0.0
    %92 = vmatprep.subr.mxu0 0.0
    %93 = vmatpush1.msra.mxu0 0.0
    %94 = vmatprep.subr.mxu0 0.0
    %95 = vmatpush1.msra.mxu0 0.0
    %96 = vmatprep.subr.mxu0 0.0
    %97 = vmatpush1.msra.mxu0 0.0
    %98 = vmatprep.subr.mxu0 0.0
    %99 = vmatpush1.msra.mxu0 0.0
    %100 = vmatprep.subr.mxu0 0.0
    %101 = vmatpush1.msra.mxu0 0.0
    %102 = vmatprep.subr.mxu0 0.0
    %103 = vmatpush1.msra.mxu0 0.0
    %104 = vmatprep.subr.mxu0 0.0
    %105 = vmatpush1.msra.mxu0 0.0
    %106 = vmatprep.subr.mxu0 0.0
    %107 = vmatpush1.msra.mxu0 0.0
    %108 = vmatprep.subr.mxu0 0.0
    %109 = vmatpush1.msra.mxu0 0.0
    %110 = vmatprep.subr.mxu0 0.0
    %111 = vmatpush1.msra.mxu0 0.0
    %112 = vmatprep.subr.mxu0 0.0
    %113 = vmatpush1.msra.mxu0 0.0
    %114 = vmatprep.subr.mxu0 0.0
    %115 = vmatpush1.msra.mxu0 0.0
    %116 = vmatprep.mubr.f32.mxu0 0.0
    %v117 = vand.u32 %v19, 4294901760
    %v118 = vsub.f32 %v19, %v117
    %v119 = vand.u32 %v118, 4294901760
    %v120 = vsub.f32 %v118, %v119
    %v121 = vand.u32 %v120, 4294901760
    %122 = vmatmul.mubr.f32.gmra.mrb[0].mxu0 %v121
    %v123 = vpop.f32.mrb[0].mxu0
    %v124 = vadd.f32 0.0, %v123
    %v125 = vpop.f32.mrb[0].mxu0
    %126 = vdwg.mxu0
    %127 = vmatprep.subr.mxu0 0.0
    %v128 = vand.u32 %v20, 4294901760
    %v129 = vsub.f32 %v20, %v128
    %v130 = vand.u32 %v129, 4294901760
    %v131 = vsub.f32 %v129, %v130
    %v132 = vand.u32 %v131, 4294901760
    %133 = vmatpush1.msra.mxu0 %v132
    %134 = vmatprep.subr.mxu0 0.0
    %v135 = vand.u32 %v21, 4294901760
    %v136 = vsub.f32 %v21, %v135
    %v137 = vand.u32 %v136, 4294901760
    %v138 = vsub.f32 %v136, %v137
    %v139 = vand.u32 %v138, 4294901760
    %140 = vmatpush1.msra.mxu0 %v139
    %141 = vmatprep.subr.mxu0 0.0
    %v142 = vand.u32 %v22, 4294901760
    %v143 = vsub.f32 %v22, %v142
    %v144 = vand.u32 %v143, 4294901760
    %v145 = vsub.f32 %v143, %v144
    %v146 = vand.u32 %v145, 4294901760
    %147 = vmatpush1.msra.mxu0 %v146
    %148 = vmatprep.subr.mxu0 0.0
    %v149 = vand.u32 %v23, 4294901760
    %v150 = vsub.f32 %v23, %v149
    %v151 = vand.u32 %v150, 4294901760
    %v152 = vsub.f32 %v150, %v151
    %v153 = vand.u32 %v152, 4294901760
    %154 = vmatpush1.msra.mxu0 %v153
    %155 = vmatprep.subr.mxu0 0.0
    %v156 = vand.u32 %v24, 4294901760
    %v157 = vsub.f32 %v24, %v156
    %v158 = vand.u32 %v157, 4294901760
    %v159 = vsub.f32 %v157, %v158
    %v160 = vand.u32 %v159, 4294901760
    %161 = vmatpush1.msra.mxu0 %v160
    %162 = vmatprep.subr.mxu0 0.0
    %v163 = vand.u32 %v25, 4294901760
    %v164 = vsub.f32 %v25, %v163
    %v165 = vand.u32 %v164, 4294901760
    %v166 = vsub.f32 %v164, %v165
    %v167 = vand.u32 %v166, 4294901760
    %168 = vmatpush1.msra.mxu0 %v167
    %169 = vmatprep.subr.mxu0 0.0
    %v170 = vand.u32 %v26, 4294901760
    %v171 = vsub.f32 %v26, %v170
    %v172 = vand.u32 %v171, 4294901760
    %v173 = vsub.f32 %v171, %v172
    %v174 = vand.u32 %v173, 4294901760
    %175 = vmatpush1.msra.mxu0 %v174
    %176 = vmatprep.subr.mxu0 0.0
    %v177 = vand.u32 %v27, 4294901760
    %v178 = vsub.f32 %v27, %v177
    %v179 = vand.u32 %v178, 4294901760
    %v180 = vsub.f32 %v178, %v179
    %v181 = vand.u32 %v180, 4294901760
    %182 = vmatpush1.msra.mxu0 %v181
    %183 = vmatprep.subr.mxu0 0.0
    %v184 = vand.u32 %v28, 4294901760
    %v185 = vsub.f32 %v28, %v184
    %v186 = vand.u32 %v185, 4294901760
    %v187 = vsub.f32 %v185, %v186
    %v188 = vand.u32 %v187, 4294901760
    %189 = vmatpush1.msra.mxu0 %v188
    %190 = vmatprep.subr.mxu0 0.0
    %v191 = vand.u32 %v29, 4294901760
    %v192 = vsub.f32 %v29, %v191
    %v193 = vand.u32 %v192, 4294901760
    %v194 = vsub.f32 %v192, %v193
    %v195 = vand.u32 %v194, 4294901760
    %196 = vmatpush1.msra.mxu0 %v195
    %197 = vmatprep.subr.mxu0 0.0
    %v198 = vand.u32 %v30, 4294901760
    %v199 = vsub.f32 %v30, %v198
    %v200 = vand.u32 %v199, 4294901760
    %v201 = vsub.f32 %v199, %v200
    %v202 = vand.u32 %v201, 4294901760
    %203 = vmatpush1.msra.mxu0 %v202
    %204 = vmatprep.subr.mxu0 0.0
    %v205 = vand.u32 %v31, 4294901760
    %v206 = vsub.f32 %v31, %v205
    %v207 = vand.u32 %v206, 4294901760
    %v208 = vsub.f32 %v206, %v207
    %v209 = vand.u32 %v208, 4294901760
    %210 = vmatpush1.msra.mxu0 %v209
    %211 = vmatprep.subr.mxu0 0.0
    %v212 = vand.u32 %v32, 4294901760
    %v213 = vsub.f32 %v32, %v212
    %v214 = vand.u32 %v213, 4294901760
    %v215 = vsub.f32 %v213, %v214
    %v216 = vand.u32 %v215, 4294901760
    %217 = vmatpush1.msra.mxu0 %v216
    %218 = vmatprep.subr.mxu0 0.0
    %v219 = vand.u32 %v33, 4294901760
    %v220 = vsub.f32 %v33, %v219
    %v221 = vand.u32 %v220, 4294901760
    %v222 = vsub.f32 %v220, %v221
    %v223 = vand.u32 %v222, 4294901760
    %224 = vmatpush1.msra.mxu0 %v223
    %225 = vmatprep.subr.mxu0 0.0
    %v226 = vand.u32 %v34, 4294901760
    %v227 = vsub.f32 %v34, %v226
    %v228 = vand.u32 %v227, 4294901760
    %v229 = vsub.f32 %v227, %v228
    %v230 = vand.u32 %v229, 4294901760
    %231 = vmatpush1.msra.mxu0 %v230
    %232 = vmatprep.subr.mxu0 0.0
    %v233 = vand.u32 %v35, 4294901760
    %v234 = vsub.f32 %v35, %v233
    %v235 = vand.u32 %v234, 4294901760
    %v236 = vsub.f32 %v234, %v235
    %v237 = vand.u32 %v236, 4294901760
    %238 = vmatpush1.msra.mxu0 %v237
    %239 = vmatprep.subr.mxu0 0.0
    %240 = vmatpush1.msra.mxu0 0.0
    %241 = vmatprep.subr.mxu0 0.0
    %242 = vmatpush1.msra.mxu0 0.0
    %243 = vmatprep.subr.mxu0 0.0
    %244 = vmatpush1.msra.mxu0 0.0
    %245 = vmatprep.subr.mxu0 0.0
    %246 = vmatpush1.msra.mxu0 0.0
    %247 = vmatprep.subr.mxu0 0.0
    %248 = vmatpush1.msra.mxu0 0.0
    %249 = vmatprep.subr.mxu0 0.0
    %250 = vmatpush1.msra.mxu0 0.0
    %251 = vmatprep.subr.mxu0 0.0
    %252 = vmatpush1.msra.mxu0 0.0
    %253 = vmatprep.subr.mxu0 0.0
    %254 = vmatpush1.msra.mxu0 0.0
    %255 = vmatprep.subr.mxu0 0.0
    %256 = vmatpush1.msra.mxu0 0.0
    %257 = vmatprep.subr.mxu0 0.0
    %258 = vmatpush1.msra.mxu0 0.0
    %259 = vmatprep.subr.mxu0 0.0
    %260 = vmatpush1.msra.mxu0 0.0
    %261 = vmatprep.subr.mxu0 0.0
    %262 = vmatpush1.msra.mxu0 0.0
    %263 = vmatprep.subr.mxu0 0.0
    %264 = vmatpush1.msra.mxu0 0.0
    %265 = vmatprep.subr.mxu0 0.0
    %266 = vmatpush1.msra.mxu0 0.0
    %267 = vmatprep.subr.mxu0 0.0
    %268 = vmatpush1.msra.mxu0 0.0
    %269 = vmatprep.subr.mxu0 0.0
    %270 = vmatpush1.msra.mxu0 0.0
    %271 = vmatprep.mubr.f32.mxu0 0.0
    %v272 = vand.u32 %v19, 4294901760
    %273 = vmatmul.mubr.f32.gmra.mrb[0].mxu0 %v272
    %v274 = vpop.f32.mrb[0].mxu0
    %v275 = vadd.f32 %v124, %v274
    %v276 = vpop.f32.mrb[0].mxu0
    %277 = vdwg.mxu0
    %278 = vmatprep.subr.mxu0 0.0
    %v279 = vand.u32 %v20, 4294901760
    %v280 = vsub.f32 %v20, %v279
    %281 = vmatpush1.msra.mxu0 %v280
    %282 = vmatprep.subr.mxu0 0.0
    %v283 = vand.u32 %v21, 4294901760
    %v284 = vsub.f32 %v21, %v283
    %285 = vmatpush1.msra.mxu0 %v284
    %286 = vmatprep.subr.mxu0 0.0
    %v287 = vand.u32 %v22, 4294901760
    %v288 = vsub.f32 %v22, %v287
    %289 = vmatpush1.msra.mxu0 %v288
    %290 = vmatprep.subr.mxu0 0.0
    %v291 = vand.u32 %v23, 4294901760
    %v292 = vsub.f32 %v23, %v291
    %293 = vmatpush1.msra.mxu0 %v292
    %294 = vmatprep.subr.mxu0 0.0
    %v295 = vand.u32 %v24, 4294901760
    %v296 = vsub.f32 %v24, %v295
    %297 = vmatpush1.msra.mxu0 %v296
    %298 = vmatprep.subr.mxu0 0.0
    %v299 = vand.u32 %v25, 4294901760
    %v300 = vsub.f32 %v25, %v299
    %301 = vmatpush1.msra.mxu0 %v300
    %302 = vmatprep.subr.mxu0 0.0
    %v303 = vand.u32 %v26, 4294901760
    %v304 = vsub.f32 %v26, %v303
    %305 = vmatpush1.msra.mxu0 %v304
    %306 = vmatprep.subr.mxu0 0.0
    %v307 = vand.u32 %v27, 4294901760
    %v308 = vsub.f32 %v27, %v307
    %309 = vmatpush1.msra.mxu0 %v308
    %310 = vmatprep.subr.mxu0 0.0
    %v311 = vand.u32 %v28, 4294901760
    %v312 = vsub.f32 %v28, %v311
    %313 = vmatpush1.msra.mxu0 %v312
    %314 = vmatprep.subr.mxu0 0.0
    %v315 = vand.u32 %v29, 4294901760
    %v316 = vsub.f32 %v29, %v315
    %317 = vmatpush1.msra.mxu0 %v316
    %318 = vmatprep.subr.mxu0 0.0
    %v319 = vand.u32 %v30, 4294901760
    %v320 = vsub.f32 %v30, %v319
    %321 = vmatpush1.msra.mxu0 %v320
    %322 = vmatprep.subr.mxu0 0.0
    %v323 = vand.u32 %v31, 4294901760
    %v324 = vsub.f32 %v31, %v323
    %325 = vmatpush1.msra.mxu0 %v324
    %326 = vmatprep.subr.mxu0 0.0
    %v327 = vand.u32 %v32, 4294901760
    %v328 = vsub.f32 %v32, %v327
    %329 = vmatpush1.msra.mxu0 %v328
    %330 = vmatprep.subr.mxu0 0.0
    %v331 = vand.u32 %v33, 4294901760
    %v332 = vsub.f32 %v33, %v331
    %333 = vmatpush1.msra.mxu0 %v332
    %334 = vmatprep.subr.mxu0 0.0
    %v335 = vand.u32 %v34, 4294901760
    %v336 = vsub.f32 %v34, %v335
    %337 = vmatpush1.msra.mxu0 %v336
    %338 = vmatprep.subr.mxu0 0.0
    %v339 = vand.u32 %v35, 4294901760
    %v340 = vsub.f32 %v35, %v339
    %341 = vmatpush1.msra.mxu0 %v340
    %342 = vmatprep.subr.mxu0 0.0
    %343 = vmatpush1.msra.mxu0 0.0
    %344 = vmatprep.subr.mxu0 0.0
    %345 = vmatpush1.msra.mxu0 0.0
    %346 = vmatprep.subr.mxu0 0.0
    %347 = vmatpush1.msra.mxu0 0.0
    %348 = vmatprep.subr.mxu0 0.0
    %349 = vmatpush1.msra.mxu0 0.0
    %350 = vmatprep.subr.mxu0 0.0
    %351 = vmatpush1.msra.mxu0 0.0
    %352 = vmatprep.subr.mxu0 0.0
    %353 = vmatpush1.msra.mxu0 0.0
    %354 = vmatprep.subr.mxu0 0.0
    %355 = vmatpush1.msra.mxu0 0.0
    %356 = vmatprep.subr.mxu0 0.0
    %357 = vmatpush1.msra.mxu0 0.0
    %358 = vmatprep.subr.mxu0 0.0
    %359 = vmatpush1.msra.mxu0 0.0
    %360 = vmatprep.subr.mxu0 0.0
    %361 = vmatpush1.msra.mxu0 0.0
    %362 = vmatprep.subr.mxu0 0.0
    %363 = vmatpush1.msra.mxu0 0.0
    %364 = vmatprep.subr.mxu0 0.0
    %365 = vmatpush1.msra.mxu0 0.0
    %366 = vmatprep.subr.mxu0 0.0
    %367 = vmatpush1.msra.mxu0 0.0
    %368 = vmatprep.subr.mxu0 0.0
    %369 = vmatpush1.msra.mxu0 0.0
    %370 = vmatprep.subr.mxu0 0.0
    %371 = vmatpush1.msra.mxu0 0.0
    %372 = vmatprep.subr.mxu0 0.0
    %373 = vmatpush1.msra.mxu0 0.0
    %374 = vmatprep.mubr.f32.mxu0 0.0
    %v375 = vand.u32 %v19, 4294901760
    %v376 = vsub.f32 %v19, %v375
    %377 = vmatmul.mubr.f32.gmra.mrb[0].mxu0 %v376
    %v378 = vpop.f32.mrb[0].mxu0
    %v379 = vadd.f32 %v275, %v378
    %v380 = vpop.f32.mrb[0].mxu0
    %381 = vdwg.mxu0
    %382 = vmatprep.subr.mxu0 0.0
    %v383 = vand.u32 %v20, 4294901760
    %384 = vmatpush1.msra.mxu0 %v383
    %385 = vmatprep.subr.mxu0 0.0
    %v386 = vand.u32 %v21, 4294901760
    %387 = vmatpush1.msra.mxu0 %v386
    %388 = vmatprep.subr.mxu0 0.0
    %v389 = vand.u32 %v22, 4294901760
    %390 = vmatpush1.msra.mxu0 %v389
    %391 = vmatprep.subr.mxu0 0.0
    %v392 = vand.u32 %v23, 4294901760
    %393 = vmatpush1.msra.mxu0 %v392
    %394 = vmatprep.subr.mxu0 0.0
    %v395 = vand.u32 %v24, 4294901760
    %396 = vmatpush1.msra.mxu0 %v395
    %397 = vmatprep.subr.mxu0 0.0
    %v398 = vand.u32 %v25, 4294901760
    %399 = vmatpush1.msra.mxu0 %v398
    %400 = vmatprep.subr.mxu0 0.0
    %v401 = vand.u32 %v26, 4294901760
    %402 = vmatpush1.msra.mxu0 %v401
    %403 = vmatprep.subr.mxu0 0.0
    %v404 = vand.u32 %v27, 4294901760
    %405 = vmatpush1.msra.mxu0 %v404
    %406 = vmatprep.subr.mxu0 0.0
    %v407 = vand.u32 %v28, 4294901760
    %408 = vmatpush1.msra.mxu0 %v407
    %409 = vmatprep.subr.mxu0 0.0
    %v410 = vand.u32 %v29, 4294901760
    %411 = vmatpush1.msra.mxu0 %v410
    %412 = vmatprep.subr.mxu0 0.0
    %v413 = vand.u32 %v30, 4294901760
    %414 = vmatpush1.msra.mxu0 %v413
    %415 = vmatprep.subr.mxu0 0.0
    %v416 = vand.u32 %v31, 4294901760
    %417 = vmatpush1.msra.mxu0 %v416
    %418 = vmatprep.subr.mxu0 0.0
    %v419 = vand.u32 %v32, 4294901760
    %420 = vmatpush1.msra.mxu0 %v419
    %421 = vmatprep.subr.mxu0 0.0
    %v422 = vand.u32 %v33, 4294901760
    %423 = vmatpush1.msra.mxu0 %v422
    %424 = vmatprep.subr.mxu0 0.0
    %v425 = vand.u32 %v34, 4294901760
    %426 = vmatpush1.msra.mxu0 %v425
    %427 = vmatprep.subr.mxu0 0.0
    %v428 = vand.u32 %v35, 4294901760
    %429 = vmatpush1.msra.mxu0 %v428
    %430 = vmatprep.subr.mxu0 0.0
    %431 = vmatpush1.msra.mxu0 0.0
    %432 = vmatprep.subr.mxu0 0.0
    %433 = vmatpush1.msra.mxu0 0.0
    %434 = vmatprep.subr.mxu0 0.0
    %435 = vmatpush1.msra.mxu0 0.0
    %436 = vmatprep.subr.mxu0 0.0
    %437 = vmatpush1.msra.mxu0 0.0
    %438 = vmatprep.subr.mxu0 0.0
    %439 = vmatpush1.msra.mxu0 0.0
    %440 = vmatprep.subr.mxu0 0.0
    %441 = vmatpush1.msra.mxu0 0.0
    %442 = vmatprep.subr.mxu0 0.0
    %443 = vmatpush1.msra.mxu0 0.0
    %444 = vmatprep.subr.mxu0 0.0
    %445 = vmatpush1.msra.mxu0 0.0
    %446 = vmatprep.subr.mxu0 0.0
    %447 = vmatpush1.msra.mxu0 0.0
    %448 = vmatprep.subr.mxu0 0.0
    %449 = vmatpush1.msra.mxu0 0.0
    %450 = vmatprep.subr.mxu0 0.0
    %451 = vmatpush1.msra.mxu0 0.0
    %452 = vmatprep.subr.mxu0 0.0
    %453 = vmatpush1.msra.mxu0 0.0
    %454 = vmatprep.subr.mxu0 0.0
    %455 = vmatpush1.msra.mxu0 0.0
    %456 = vmatprep.subr.mxu0 0.0
    %457 = vmatpush1.msra.mxu0 0.0
    %458 = vmatprep.subr.mxu0 0.0
    %459 = vmatpush1.msra.mxu0 0.0
    %460 = vmatprep.subr.mxu0 0.0
    %461 = vmatpush1.msra.mxu0 0.0
    %462 = vmatprep.mubr.f32.mxu0 0.0
    %v463 = vand.u32 %v19, 4294901760
    %v464 = vsub.f32 %v19, %v463
    %v465 = vand.u32 %v464, 4294901760
    %466 = vmatmul.mubr.f32.gmra.mrb[0].mxu0 %v465
    %v467 = vpop.f32.mrb[0].mxu0
    %v468 = vadd.f32 %v379, %v467
    %v469 = vpop.f32.mrb[0].mxu0
    %470 = vdwg.mxu0
    %471 = vmatprep.subr.mxu0 0.0
    %v472 = vand.u32 %v20, 4294901760
    %v473 = vsub.f32 %v20, %v472
    %v474 = vand.u32 %v473, 4294901760
    %475 = vmatpush1.msra.mxu0 %v474
    %476 = vmatprep.subr.mxu0 0.0
    %v477 = vand.u32 %v21, 4294901760
    %v478 = vsub.f32 %v21, %v477
    %v479 = vand.u32 %v478, 4294901760
    %480 = vmatpush1.msra.mxu0 %v479
    %481 = vmatprep.subr.mxu0 0.0
    %v482 = vand.u32 %v22, 4294901760
    %v483 = vsub.f32 %v22, %v482
    %v484 = vand.u32 %v483, 4294901760
    %485 = vmatpush1.msra.mxu0 %v484
    %486 = vmatprep.subr.mxu0 0.0
    %v487 = vand.u32 %v23, 4294901760
    %v488 = vsub.f32 %v23, %v487
    %v489 = vand.u32 %v488, 4294901760
    %490 = vmatpush1.msra.mxu0 %v489
    %491 = vmatprep.subr.mxu0 0.0
    %v492 = vand.u32 %v24, 4294901760
    %v493 = vsub.f32 %v24, %v492
    %v494 = vand.u32 %v493, 4294901760
    %495 = vmatpush1.msra.mxu0 %v494
    %496 = vmatprep.subr.mxu0 0.0
    %v497 = vand.u32 %v25, 4294901760
    %v498 = vsub.f32 %v25, %v497
    %v499 = vand.u32 %v498, 4294901760
    %500 = vmatpush1.msra.mxu0 %v499
    %501 = vmatprep.subr.mxu0 0.0
    %v502 = vand.u32 %v26, 4294901760
    %v503 = vsub.f32 %v26, %v502
    %v504 = vand.u32 %v503, 4294901760
    %505 = vmatpush1.msra.mxu0 %v504
    %506 = vmatprep.subr.mxu0 0.0
    %v507 = vand.u32 %v27, 4294901760
    %v508 = vsub.f32 %v27, %v507
    %v509 = vand.u32 %v508, 4294901760
    %510 = vmatpush1.msra.mxu0 %v509
    %511 = vmatprep.subr.mxu0 0.0
    %v512 = vand.u32 %v28, 4294901760
    %v513 = vsub.f32 %v28, %v512
    %v514 = vand.u32 %v513, 4294901760
    %515 = vmatpush1.msra.mxu0 %v514
    %516 = vmatprep.subr.mxu0 0.0
    %v517 = vand.u32 %v29, 4294901760
    %v518 = vsub.f32 %v29, %v517
    %v519 = vand.u32 %v518, 4294901760
    %520 = vmatpush1.msra.mxu0 %v519
    %521 = vmatprep.subr.mxu0 0.0
    %v522 = vand.u32 %v30, 4294901760
    %v523 = vsub.f32 %v30, %v522
    %v524 = vand.u32 %v523, 4294901760
    %525 = vmatpush1.msra.mxu0 %v524
    %526 = vmatprep.subr.mxu0 0.0
    %v527 = vand.u32 %v31, 4294901760
    %v528 = vsub.f32 %v31, %v527
    %v529 = vand.u32 %v528, 4294901760
    %530 = vmatpush1.msra.mxu0 %v529
    %531 = vmatprep.subr.mxu0 0.0
    %v532 = vand.u32 %v32, 4294901760
    %v533 = vsub.f32 %v32, %v532
    %v534 = vand.u32 %v533, 4294901760
    %535 = vmatpush1.msra.mxu0 %v534
    %536 = vmatprep.subr.mxu0 0.0
    %v537 = vand.u32 %v33, 4294901760
    %v538 = vsub.f32 %v33, %v537
    %v539 = vand.u32 %v538, 4294901760
    %540 = vmatpush1.msra.mxu0 %v539
    %541 = vmatprep.subr.mxu0 0.0
    %v542 = vand.u32 %v34, 4294901760
    %v543 = vsub.f32 %v34, %v542
    %v544 = vand.u32 %v543, 4294901760
    %545 = vmatpush1.msra.mxu0 %v544
    %546 = vmatprep.subr.mxu0 0.0
    %v547 = vand.u32 %v35, 4294901760
    %v548 = vsub.f32 %v35, %v547
    %v549 = vand.u32 %v548, 4294901760
    %550 = vmatpush1.msra.mxu0 %v549
    %551 = vmatprep.subr.mxu0 0.0
    %552 = vmatpush1.msra.mxu0 0.0
    %553 = vmatprep.subr.mxu0 0.0
    %554 = vmatpush1.msra.mxu0 0.0
    %555 = vmatprep.subr.mxu0 0.0
    %556 = vmatpush1.msra.mxu0 0.0
    %557 = vmatprep.subr.mxu0 0.0
    %558 = vmatpush1.msra.mxu0 0.0
    %559 = vmatprep.subr.mxu0 0.0
    %560 = vmatpush1.msra.mxu0 0.0
    %561 = vmatprep.subr.mxu0 0.0
    %562 = vmatpush1.msra.mxu0 0.0
    %563 = vmatprep.subr.mxu0 0.0
    %564 = vmatpush1.msra.mxu0 0.0
    %565 = vmatprep.subr.mxu0 0.0
    %566 = vmatpush1.msra.mxu0 0.0
    %567 = vmatprep.subr.mxu0 0.0
    %568 = vmatpush1.msra.mxu0 0.0
    %569 = vmatprep.subr.mxu0 0.0
    %570 = vmatpush1.msra.mxu0 0.0
    %571 = vmatprep.subr.mxu0 0.0
    %572 = vmatpush1.msra.mxu0 0.0
    %573 = vmatprep.subr.mxu0 0.0
    %574 = vmatpush1.msra.mxu0 0.0
    %575 = vmatprep.subr.mxu0 0.0
    %576 = vmatpush1.msra.mxu0 0.0
    %577 = vmatprep.subr.mxu0 0.0
    %578 = vmatpush1.msra.mxu0 0.0
    %579 = vmatprep.subr.mxu0 0.0
    %580 = vmatpush1.msra.mxu0 0.0
    %581 = vmatprep.subr.mxu0 0.0
    %582 = vmatpush1.msra.mxu0 0.0
    %583 = vmatprep.mubr.f32.mxu0 0.0
    %v584 = vand.u32 %v19, 4294901760
    %585 = vmatmul.mubr.f32.gmra.mrb[0].mxu0 %v584
    %v586 = vpop.f32.mrb[0].mxu0
    %v587 = vadd.f32 %v468, %v586
    %v588 = vpop.f32.mrb[0].mxu0
    %589 = vdwg.mxu0
    %590 = vmatprep.subr.mxu0 0.0
    %v591 = vand.u32 %v20, 4294901760
    %592 = vmatpush1.msra.mxu0 %v591
    %593 = vmatprep.subr.mxu0 0.0
    %v594 = vand.u32 %v21, 4294901760
    %595 = vmatpush1.msra.mxu0 %v594
    %596 = vmatprep.subr.mxu0 0.0
    %v597 = vand.u32 %v22, 4294901760
    %598 = vmatpush1.msra.mxu0 %v597
    %599 = vmatprep.subr.mxu0 0.0
    %v600 = vand.u32 %v23, 4294901760
    %601 = vmatpush1.msra.mxu0 %v600
    %602 = vmatprep.subr.mxu0 0.0
    %v603 = vand.u32 %v24, 4294901760
    %604 = vmatpush1.msra.mxu0 %v603
    %605 = vmatprep.subr.mxu0 0.0
    %v606 = vand.u32 %v25, 4294901760
    %607 = vmatpush1.msra.mxu0 %v606
    %608 = vmatprep.subr.mxu0 0.0
    %v609 = vand.u32 %v26, 4294901760
    %610 = vmatpush1.msra.mxu0 %v609
    %611 = vmatprep.subr.mxu0 0.0
    %v612 = vand.u32 %v27, 4294901760
    %613 = vmatpush1.msra.mxu0 %v612
    %614 = vmatprep.subr.mxu0 0.0
    %v615 = vand.u32 %v28, 4294901760
    %616 = vmatpush1.msra.mxu0 %v615
    %617 = vmatprep.subr.mxu0 0.0
    %v618 = vand.u32 %v29, 4294901760
    %619 = vmatpush1.msra.mxu0 %v618
    %620 = vmatprep.subr.mxu0 0.0
    %v621 = vand.u32 %v30, 4294901760
    %622 = vmatpush1.msra.mxu0 %v621
    %623 = vmatprep.subr.mxu0 0.0
    %v624 = vand.u32 %v31, 4294901760
    %625 = vmatpush1.msra.mxu0 %v624
    %626 = vmatprep.subr.mxu0 0.0
    %v627 = vand.u32 %v32, 4294901760
    %628 = vmatpush1.msra.mxu0 %v627
    %629 = vmatprep.subr.mxu0 0.0
    %v630 = vand.u32 %v33, 4294901760
    %631 = vmatpush1.msra.mxu0 %v630
    %632 = vmatprep.subr.mxu0 0.0
    %v633 = vand.u32 %v34, 4294901760
    %634 = vmatpush1.msra.mxu0 %v633
    %635 = vmatprep.subr.mxu0 0.0
    %v636 = vand.u32 %v35, 4294901760
    %637 = vmatpush1.msra.mxu0 %v636
    %638 = vmatprep.subr.mxu0 0.0
    %639 = vmatpush1.msra.mxu0 0.0
    %640 = vmatprep.subr.mxu0 0.0
    %641 = vmatpush1.msra.mxu0 0.0
    %642 = vmatprep.subr.mxu0 0.0
    %643 = vmatpush1.msra.mxu0 0.0
    %644 = vmatprep.subr.mxu0 0.0
    %645 = vmatpush1.msra.mxu0 0.0
    %646 = vmatprep.subr.mxu0 0.0
    %647 = vmatpush1.msra.mxu0 0.0
    %648 = vmatprep.subr.mxu0 0.0
    %649 = vmatpush1.msra.mxu0 0.0
    %650 = vmatprep.subr.mxu0 0.0
    %651 = vmatpush1.msra.mxu0 0.0
    %652 = vmatprep.subr.mxu0 0.0
    %653 = vmatpush1.msra.mxu0 0.0
    %654 = vmatprep.subr.mxu0 0.0
    %655 = vmatpush1.msra.mxu0 0.0
    %656 = vmatprep.subr.mxu0 0.0
    %657 = vmatpush1.msra.mxu0 0.0
    %658 = vmatprep.subr.mxu0 0.0
    %659 = vmatpush1.msra.mxu0 0.0
    %660 = vmatprep.subr.mxu0 0.0
    %661 = vmatpush1.msra.mxu0 0.0
    %662 = vmatprep.subr.mxu0 0.0
    %663 = vmatpush1.msra.mxu0 0.0
    %664 = vmatprep.subr.mxu0 0.0
    %665 = vmatpush1.msra.mxu0 0.0
    %666 = vmatprep.subr.mxu0 0.0
    %667 = vmatpush1.msra.mxu0 0.0
    %668 = vmatprep.subr.mxu0 0.0
    %669 = vmatpush1.msra.mxu0 0.0
    %670 = vmatprep.mubr.f32.mxu0 0.0
    %v671 = vand.u32 %v19, 4294901760
    %672 = vmatmul.mubr.f32.gmra.mrb[0].mxu0 %v671
    %v673 = vpop.f32.mrb[0].mxu0
    %v674 = vadd.f32 %v587, %v673
    %v675 = vpop.f32.mrb[0].mxu0
    %676 = vdwg.mxu0
    %v677 = vmul.f32 %v674, 0.03125
    %v678 = vsub.f32 %v19, %v677
    %v679 = vmul.f32 %v678, %v678
    %680 = vmatprep.subr.mxu0 0.0
    %v681 = vand.u32 %v20, 4294901760
    %682 = vmatpush1.msra.mxu0 %v681
    %683 = vmatprep.subr.mxu0 0.0
    %v684 = vand.u32 %v21, 4294901760
    %685 = vmatpush1.msra.mxu0 %v684
    %686 = vmatprep.subr.mxu0 0.0
    %v687 = vand.u32 %v22, 4294901760
    %688 = vmatpush1.msra.mxu0 %v687
    %689 = vmatprep.subr.mxu0 0.0
    %v690 = vand.u32 %v23, 4294901760
    %691 = vmatpush1.msra.mxu0 %v690
    %692 = vmatprep.subr.mxu0 0.0
    %v693 = vand.u32 %v24, 4294901760
    %694 = vmatpush1.msra.mxu0 %v693
    %695 = vmatprep.subr.mxu0 0.0
    %v696 = vand.u32 %v25, 4294901760
    %697 = vmatpush1.msra.mxu0 %v696
    %698 = vmatprep.subr.mxu0 0.0
    %v699 = vand.u32 %v26, 4294901760
    %700 = vmatpush1.msra.mxu0 %v699
    %701 = vmatprep.subr.mxu0 0.0
    %v702 = vand.u32 %v27, 4294901760
    %703 = vmatpush1.msra.mxu0 %v702
    %704 = vmatprep.subr.mxu0 0.0
    %v705 = vand.u32 %v28, 4294901760
    %706 = vmatpush1.msra.mxu0 %v705
    %707 = vmatprep.subr.mxu0 0.0
    %v708 = vand.u32 %v29, 4294901760
    %709 = vmatpush1.msra.mxu0 %v708
    %710 = vmatprep.subr.mxu0 0.0
    %v711 = vand.u32 %v30, 4294901760
    %712 = vmatpush1.msra.mxu0 %v711
    %713 = vmatprep.subr.mxu0 0.0
    %v714 = vand.u32 %v31, 4294901760
    %715 = vmatpush1.msra.mxu0 %v714
    %716 = vmatprep.subr.mxu0 0.0
    %v717 = vand.u32 %v32, 4294901760
    %718 = vmatpush1.msra.mxu0 %v717
    %719 = vmatprep.subr.mxu0 0.0
    %v720 = vand.u32 %v33, 4294901760
    %721 = vmatpush1.msra.mxu0 %v720
    %722 = vmatprep.subr.mxu0 0.0
    %v723 = vand.u32 %v34, 4294901760
    %724 = vmatpush1.msra.mxu0 %v723
    %725 = vmatprep.subr.mxu0 0.0
    %v726 = vand.u32 %v35, 4294901760
    %727 = vmatpush1.msra.mxu0 %v726
    %728 = vmatprep.subr.mxu0 0.0
    %729 = vmatpush1.msra.mxu0 0.0
    %730 = vmatprep.subr.mxu0 0.0
    %731 = vmatpush1.msra.mxu0 0.0
    %732 = vmatprep.subr.mxu0 0.0
    %733 = vmatpush1.msra.mxu0 0.0
    %734 = vmatprep.subr.mxu0 0.0
    %735 = vmatpush1.msra.mxu0 0.0
    %736 = vmatprep.subr.mxu0 0.0
    %737 = vmatpush1.msra.mxu0 0.0
    %738 = vmatprep.subr.mxu0 0.0
    %739 = vmatpush1.msra.mxu0 0.0
    %740 = vmatprep.subr.mxu0 0.0
    %741 = vmatpush1.msra.mxu0 0.0
    %742 = vmatprep.subr.mxu0 0.0
    %743 = vmatpush1.msra.mxu0 0.0
    %744 = vmatprep.subr.mxu0 0.0
    %745 = vmatpush1.msra.mxu0 0.0
    %746 = vmatprep.subr.mxu0 0.0
    %747 = vmatpush1.msra.mxu0 0.0
    %748 = vmatprep.subr.mxu0 0.0
    %749 = vmatpush1.msra.mxu0 0.0
    %750 = vmatprep.subr.mxu0 0.0
    %751 = vmatpush1.msra.mxu0 0.0
    %752 = vmatprep.subr.mxu0 0.0
    %753 = vmatpush1.msra.mxu0 0.0
    %754 = vmatprep.subr.mxu0 0.0
    %755 = vmatpush1.msra.mxu0 0.0
    %756 = vmatprep.subr.mxu0 0.0
    %757 = vmatpush1.msra.mxu0 0.0
    %758 = vmatprep.subr.mxu0 0.0
    %759 = vmatpush1.msra.mxu0 0.0
    %760 = vmatprep.mubr.f32.mxu0 0.0
    %v761 = vand.u32 %v679, 4294901760
    %v762 = vsub.f32 %v679, %v761
    %v763 = vand.u32 %v762, 4294901760
    %v764 = vsub.f32 %v762, %v763
    %v765 = vand.u32 %v764, 4294901760
    %766 = vmatmul.mubr.f32.gmra.mrb[0].mxu0 %v765
    %v767 = vpop.f32.mrb[0].mxu0
    %v768 = vadd.f32 0.0, %v767
    %v769 = vpop.f32.mrb[0].mxu0
    %770 = vdwg.mxu0
    %771 = vmatprep.subr.mxu0 0.0
    %v772 = vand.u32 %v20, 4294901760
    %v773 = vsub.f32 %v20, %v772
    %v774 = vand.u32 %v773, 4294901760
    %v775 = vsub.f32 %v773, %v774
    %v776 = vand.u32 %v775, 4294901760
    %777 = vmatpush1.msra.mxu0 %v776
    %778 = vmatprep.subr.mxu0 0.0
    %v779 = vand.u32 %v21, 4294901760
    %v780 = vsub.f32 %v21, %v779
    %v781 = vand.u32 %v780, 4294901760
    %v782 = vsub.f32 %v780, %v781
    %v783 = vand.u32 %v782, 4294901760
    %784 = vmatpush1.msra.mxu0 %v783
    %785 = vmatprep.subr.mxu0 0.0
    %v786 = vand.u32 %v22, 4294901760
    %v787 = vsub.f32 %v22, %v786
    %v788 = vand.u32 %v787, 4294901760
    %v789 = vsub.f32 %v787, %v788
    %v790 = vand.u32 %v789, 4294901760
    %791 = vmatpush1.msra.mxu0 %v790
    %792 = vmatprep.subr.mxu0 0.0
    %v793 = vand.u32 %v23, 4294901760
    %v794 = vsub.f32 %v23, %v793
    %v795 = vand.u32 %v794, 4294901760
    %v796 = vsub.f32 %v794, %v795
    %v797 = vand.u32 %v796, 4294901760
    %798 = vmatpush1.msra.mxu0 %v797
    %799 = vmatprep.subr.mxu0 0.0
    %v800 = vand.u32 %v24, 4294901760
    %v801 = vsub.f32 %v24, %v800
    %v802 = vand.u32 %v801, 4294901760
    %v803 = vsub.f32 %v801, %v802
    %v804 = vand.u32 %v803, 4294901760
    %805 = vmatpush1.msra.mxu0 %v804
    %806 = vmatprep.subr.mxu0 0.0
    %v807 = vand.u32 %v25, 4294901760
    %v808 = vsub.f32 %v25, %v807
    %v809 = vand.u32 %v808, 4294901760
    %v810 = vsub.f32 %v808, %v809
    %v811 = vand.u32 %v810, 4294901760
    %812 = vmatpush1.msra.mxu0 %v811
    %813 = vmatprep.subr.mxu0 0.0
    %v814 = vand.u32 %v26, 4294901760
    %v815 = vsub.f32 %v26, %v814
    %v816 = vand.u32 %v815, 4294901760
    %v817 = vsub.f32 %v815, %v816
    %v818 = vand.u32 %v817, 4294901760
    %819 = vmatpush1.msra.mxu0 %v818
    %820 = vmatprep.subr.mxu0 0.0
    %v821 = vand.u32 %v27, 4294901760
    %v822 = vsub.f32 %v27, %v821
    %v823 = vand.u32 %v822, 4294901760
    %v824 = vsub.f32 %v822, %v823
    %v825 = vand.u32 %v824, 4294901760
    %826 = vmatpush1.msra.mxu0 %v825
    %827 = vmatprep.subr.mxu0 0.0
    %v828 = vand.u32 %v28, 4294901760
    %v829 = vsub.f32 %v28, %v828
    %v830 = vand.u32 %v829, 4294901760
    %v831 = vsub.f32 %v829, %v830
    %v832 = vand.u32 %v831, 4294901760
    %833 = vmatpush1.msra.mxu0 %v832
    %834 = vmatprep.subr.mxu0 0.0
    %v835 = vand.u32 %v29, 4294901760
    %v836 = vsub.f32 %v29, %v835
    %v837 = vand.u32 %v836, 4294901760
    %v838 = vsub.f32 %v836, %v837
    %v839 = vand.u32 %v838, 4294901760
    %840 = vmatpush1.msra.mxu0 %v839
    %841 = vmatprep.subr.mxu0 0.0
    %v842 = vand.u32 %v30, 4294901760
    %v843 = vsub.f32 %v30, %v842
    %v844 = vand.u32 %v843, 4294901760
    %v845 = vsub.f32 %v843, %v844
    %v846 = vand.u32 %v845, 4294901760
    %847 = vmatpush1.msra.mxu0 %v846
    %848 = vmatprep.subr.mxu0 0.0
    %v849 = vand.u32 %v31, 4294901760
    %v850 = vsub.f32 %v31, %v849
    %v851 = vand.u32 %v850, 4294901760
    %v852 = vsub.f32 %v850, %v851
    %v853 = vand.u32 %v852, 4294901760
    %854 = vmatpush1.msra.mxu0 %v853
    %855 = vmatprep.subr.mxu0 0.0
    %v856 = vand.u32 %v32, 4294901760
    %v857 = vsub.f32 %v32, %v856
    %v858 = vand.u32 %v857, 4294901760
    %v859 = vsub.f32 %v857, %v858
    %v860 = vand.u32 %v859, 4294901760
    %861 = vmatpush1.msra.mxu0 %v860
    %862 = vmatprep.subr.mxu0 0.0
    %v863 = vand.u32 %v33, 4294901760
    %v864 = vsub.f32 %v33, %v863
    %v865 = vand.u32 %v864, 4294901760
    %v866 = vsub.f32 %v864, %v865
    %v867 = vand.u32 %v866, 4294901760
    %868 = vmatpush1.msra.mxu0 %v867
    %869 = vmatprep.subr.mxu0 0.0
    %v870 = vand.u32 %v34, 4294901760
    %v871 = vsub.f32 %v34, %v870
    %v872 = vand.u32 %v871, 4294901760
    %v873 = vsub.f32 %v871, %v872
    %v874 = vand.u32 %v873, 4294901760
    %875 = vmatpush1.msra.mxu0 %v874
    %876 = vmatprep.subr.mxu0 0.0
    %v877 = vand.u32 %v35, 4294901760
    %v878 = vsub.f32 %v35, %v877
    %v879 = vand.u32 %v878, 4294901760
    %v880 = vsub.f32 %v878, %v879
    %v881 = vand.u32 %v880, 4294901760
    %882 = vmatpush1.msra.mxu0 %v881
    %883 = vmatprep.subr.mxu0 0.0
    %884 = vmatpush1.msra.mxu0 0.0
    %885 = vmatprep.subr.mxu0 0.0
    %886 = vmatpush1.msra.mxu0 0.0
    %887 = vmatprep.subr.mxu0 0.0
    %888 = vmatpush1.msra.mxu0 0.0
    %889 = vmatprep.subr.mxu0 0.0
    %890 = vmatpush1.msra.mxu0 0.0
    %891 = vmatprep.subr.mxu0 0.0
    %892 = vmatpush1.msra.mxu0 0.0
    %893 = vmatprep.subr.mxu0 0.0
    %894 = vmatpush1.msra.mxu0 0.0
    %895 = vmatprep.subr.mxu0 0.0
    %896 = vmatpush1.msra.mxu0 0.0
    %897 = vmatprep.subr.mxu0 0.0
    %898 = vmatpush1.msra.mxu0 0.0
    %899 = vmatprep.subr.mxu0 0.0
    %900 = vmatpush1.msra.mxu0 0.0
    %901 = vmatprep.subr.mxu0 0.0
    %902 = vmatpush1.msra.mxu0 0.0
    %903 = vmatprep.subr.mxu0 0.0
    %904 = vmatpush1.msra.mxu0 0.0
    %905 = vmatprep.subr.mxu0 0.0
    %906 = vmatpush1.msra.mxu0 0.0
    %907 = vmatprep.subr.mxu0 0.0
    %908 = vmatpush1.msra.mxu0 0.0
    %909 = vmatprep.subr.mxu0 0.0
    %910 = vmatpush1.msra.mxu0 0.0
    %911 = vmatprep.subr.mxu0 0.0
    %912 = vmatpush1.msra.mxu0 0.0
    %913 = vmatprep.subr.mxu0 0.0
    %914 = vmatpush1.msra.mxu0 0.0
    %915 = vmatprep.mubr.f32.mxu0 0.0
    %v916 = vand.u32 %v679, 4294901760
    %917 = vmatmul.mubr.f32.gmra.mrb[0].mxu0 %v916
    %v918 = vpop.f32.mrb[0].mxu0
    %v919 = vadd.f32 %v768, %v918
    %v920 = vpop.f32.mrb[0].mxu0
    %921 = vdwg.mxu0
    %922 = vmatprep.subr.mxu0 0.0
    %v923 = vand.u32 %v20, 4294901760
    %v924 = vsub.f32 %v20, %v923
    %925 = vmatpush1.msra.mxu0 %v924
    %926 = vmatprep.subr.mxu0 0.0
    %v927 = vand.u32 %v21, 4294901760
    %v928 = vsub.f32 %v21, %v927
    %929 = vmatpush1.msra.mxu0 %v928
    %930 = vmatprep.subr.mxu0 0.0
    %v931 = vand.u32 %v22, 4294901760
    %v932 = vsub.f32 %v22, %v931
    %933 = vmatpush1.msra.mxu0 %v932
    %934 = vmatprep.subr.mxu0 0.0
    %v935 = vand.u32 %v23, 4294901760
    %v936 = vsub.f32 %v23, %v935
    %937 = vmatpush1.msra.mxu0 %v936
    %938 = vmatprep.subr.mxu0 0.0
    %v939 = vand.u32 %v24, 4294901760
    %v940 = vsub.f32 %v24, %v939
    %941 = vmatpush1.msra.mxu0 %v940
    %942 = vmatprep.subr.mxu0 0.0
    %v943 = vand.u32 %v25, 4294901760
    %v944 = vsub.f32 %v25, %v943
    %945 = vmatpush1.msra.mxu0 %v944
    %946 = vmatprep.subr.mxu0 0.0
    %v947 = vand.u32 %v26, 4294901760
    %v948 = vsub.f32 %v26, %v947
    %949 = vmatpush1.msra.mxu0 %v948
    %950 = vmatprep.subr.mxu0 0.0
    %v951 = vand.u32 %v27, 4294901760
    %v952 = vsub.f32 %v27, %v951
    %953 = vmatpush1.msra.mxu0 %v952
    %954 = vmatprep.subr.mxu0 0.0
    %v955 = vand.u32 %v28, 4294901760
    %v956 = vsub.f32 %v28, %v955
    %957 = vmatpush1.msra.mxu0 %v956
    %958 = vmatprep.subr.mxu0 0.0
    %v959 = vand.u32 %v29, 4294901760
    %v960 = vsub.f32 %v29, %v959
    %961 = vmatpush1.msra.mxu0 %v960
    %962 = vmatprep.subr.mxu0 0.0
    %v963 = vand.u32 %v30, 4294901760
    %v964 = vsub.f32 %v30, %v963
    %965 = vmatpush1.msra.mxu0 %v964
    %966 = vmatprep.subr.mxu0 0.0
    %v967 = vand.u32 %v31, 4294901760
    %v968 = vsub.f32 %v31, %v967
    %969 = vmatpush1.msra.mxu0 %v968
    %970 = vmatprep.subr.mxu0 0.0
    %v971 = vand.u32 %v32, 4294901760
    %v972 = vsub.f32 %v32, %v971
    %973 = vmatpush1.msra.mxu0 %v972
    %974 = vmatprep.subr.mxu0 0.0
    %v975 = vand.u32 %v33, 4294901760
    %v976 = vsub.f32 %v33, %v975
    %977 = vmatpush1.msra.mxu0 %v976
    %978 = vmatprep.subr.mxu0 0.0
    %v979 = vand.u32 %v34, 4294901760
    %v980 = vsub.f32 %v34, %v979
    %981 = vmatpush1.msra.mxu0 %v980
    %982 = vmatprep.subr.mxu0 0.0
    %v983 = vand.u32 %v35, 4294901760
    %v984 = vsub.f32 %v35, %v983
    %985 = vmatpush1.msra.mxu0 %v984
    %986 = vmatprep.subr.mxu0 0.0
    %987 = vmatpush1.msra.mxu0 0.0
    %988 = vmatprep.subr.mxu0 0.0
    %989 = vmatpush1.msra.mxu0 0.0
    %990 = vmatprep.subr.mxu0 0.0
    %991 = vmatpush1.msra.mxu0 0.0
    %992 = vmatprep.subr.mxu0 0.0
    %993 = vmatpush1.msra.mxu0 0.0
    %994 = vmatprep.subr.mxu0 0.0
    %995 = vmatpush1.msra.mxu0 0.0
    %996 = vmatprep.subr.mxu0 0.0
    %997 = vmatpush1.msra.mxu0 0.0
    %998 = vmatprep.subr.mxu0 0.0
    %999 = vmatpush1.msra.mxu0 0.0
    %1000 = vmatprep.subr.mxu0 0.0
    %1001 = vmatpush1.msra.mxu0 0.0
    %1002 = vmatprep.subr.mxu0 0.0
    %1003 = vmatpush1.msra.mxu0 0.0
    %1004 = vmatprep.subr.mxu0 0.0
    %1005 = vmatpush1.msra.mxu0 0.0
    %1006 = vmatprep.subr.mxu0 0.0
    %1007 = vmatpush1.msra.mxu0 0.0
    %1008 = vmatprep.subr.mxu0 0.0
    %1009 = vmatpush1.msra.mxu0 0.0
    %1010 = vmatprep.subr.mxu0 0.0
    %1011 = vmatpush1.msra.mxu0 0.0
    %1012 = vmatprep.subr.mxu0 0.0
    %1013 = vmatpush1.msra.mxu0 0.0
    %1014 = vmatprep.subr.mxu0 0.0
    %1015 = vmatpush1.msra.mxu0 0.0
    %1016 = vmatprep.subr.mxu0 0.0
    %1017 = vmatpush1.msra.mxu0 0.0
    %1018 = vmatprep.mubr.f32.mxu0 0.0
    %v1019 = vand.u32 %v679, 4294901760
    %v1020 = vsub.f32 %v679, %v1019
    %1021 = vmatmul.mubr.f32.gmra.mrb[0].mxu0 %v1020
    %v1022 = vpop.f32.mrb[0].mxu0
    %v1023 = vadd.f32 %v919, %v1022
    %v1024 = vpop.f32.mrb[0].mxu0
    %1025 = vdwg.mxu0
    %1026 = vmatprep.subr.mxu0 0.0
    %v1027 = vand.u32 %v20, 4294901760
    %1028 = vmatpush1.msra.mxu0 %v1027
    %1029 = vmatprep.subr.mxu0 0.0
    %v1030 = vand.u32 %v21, 4294901760
    %1031 = vmatpush1.msra.mxu0 %v1030
    %1032 = vmatprep.subr.mxu0 0.0
    %v1033 = vand.u32 %v22, 4294901760
    %1034 = vmatpush1.msra.mxu0 %v1033
    %1035 = vmatprep.subr.mxu0 0.0
    %v1036 = vand.u32 %v23, 4294901760
    %1037 = vmatpush1.msra.mxu0 %v1036
    %1038 = vmatprep.subr.mxu0 0.0
    %v1039 = vand.u32 %v24, 4294901760
    %1040 = vmatpush1.msra.mxu0 %v1039
    %1041 = vmatprep.subr.mxu0 0.0
    %v1042 = vand.u32 %v25, 4294901760
    %1043 = vmatpush1.msra.mxu0 %v1042
    %1044 = vmatprep.subr.mxu0 0.0
    %v1045 = vand.u32 %v26, 4294901760
    %1046 = vmatpush1.msra.mxu0 %v1045
    %1047 = vmatprep.subr.mxu0 0.0
    %v1048 = vand.u32 %v27, 4294901760
    %1049 = vmatpush1.msra.mxu0 %v1048
    %1050 = vmatprep.subr.mxu0 0.0
    %v1051 = vand.u32 %v28, 4294901760
    %1052 = vmatpush1.msra.mxu0 %v1051
    %1053 = vmatprep.subr.mxu0 0.0
    %v1054 = vand.u32 %v29, 4294901760
    %1055 = vmatpush1.msra.mxu0 %v1054
    %1056 = vmatprep.subr.mxu0 0.0
    %v1057 = vand.u32 %v30, 4294901760
    %1058 = vmatpush1.msra.mxu0 %v1057
    %1059 = vmatprep.subr.mxu0 0.0
    %v1060 = vand.u32 %v31, 4294901760
    %1061 = vmatpush1.msra.mxu0 %v1060
    %1062 = vmatprep.subr.mxu0 0.0
    %v1063 = vand.u32 %v32, 4294901760
    %1064 = vmatpush1.msra.mxu0 %v1063
    %1065 = vmatprep.subr.mxu0 0.0
    %v1066 = vand.u32 %v33, 4294901760
    %1067 = vmatpush1.msra.mxu0 %v1066
    %1068 = vmatprep.subr.mxu0 0.0
    %v1069 = vand.u32 %v34, 4294901760
    %1070 = vmatpush1.msra.mxu0 %v1069
    %1071 = vmatprep.subr.mxu0 0.0
    %v1072 = vand.u32 %v35, 4294901760
    %1073 = vmatpush1.msra.mxu0 %v1072
    %1074 = vmatprep.subr.mxu0 0.0
    %1075 = vmatpush1.msra.mxu0 0.0
    %1076 = vmatprep.subr.mxu0 0.0
    %1077 = vmatpush1.msra.mxu0 0.0
    %1078 = vmatprep.subr.mxu0 0.0
    %1079 = vmatpush1.msra.mxu0 0.0
    %1080 = vmatprep.subr.mxu0 0.0
    %1081 = vmatpush1.msra.mxu0 0.0
    %1082 = vmatprep.subr.mxu0 0.0
    %1083 = vmatpush1.msra.mxu0 0.0
    %1084 = vmatprep.subr.mxu0 0.0
    %1085 = vmatpush1.msra.mxu0 0.0
    %1086 = vmatprep.subr.mxu0 0.0
    %1087 = vmatpush1.msra.mxu0 0.0
    %1088 = vmatprep.subr.mxu0 0.0
    %1089 = vmatpush1.msra.mxu0 0.0
    %1090 = vmatprep.subr.mxu0 0.0
    %1091 = vmatpush1.msra.mxu0 0.0
    %1092 = vmatprep.subr.mxu0 0.0
    %1093 = vmatpush1.msra.mxu0 0.0
    %1094 = vmatprep.subr.mxu0 0.0
    %1095 = vmatpush1.msra.mxu0 0.0
    %1096 = vmatprep.subr.mxu0 0.0
    %1097 = vmatpush1.msra.mxu0 0.0
    %1098 = vmatprep.subr.mxu0 0.0
    %1099 = vmatpush1.msra.mxu0 0.0
    %1100 = vmatprep.subr.mxu0 0.0
    %1101 = vmatpush1.msra.mxu0 0.0
    %1102 = vmatprep.subr.mxu0 0.0
    %1103 = vmatpush1.msra.mxu0 0.0
    %1104 = vmatprep.subr.mxu0 0.0
    %1105 = vmatpush1.msra.mxu0 0.0
    %1106 = vmatprep.mubr.f32.mxu0 0.0
    %v1107 = vand.u32 %v679, 4294901760
    %v1108 = vsub.f32 %v679, %v1107
    %v1109 = vand.u32 %v1108, 4294901760
    %1110 = vmatmul.mubr.f32.gmra.mrb[0].mxu0 %v1109
    %v1111 = vpop.f32.mrb[0].mxu0
    %v1112 = vadd.f32 %v1023, %v1111
    %v1113 = vpop.f32.mrb[0].mxu0
    %1114 = vdwg.mxu0
    %1115 = vmatprep.subr.mxu0 0.0
    %v1116 = vand.u32 %v20, 4294901760
    %v1117 = vsub.f32 %v20, %v1116
    %v1118 = vand.u32 %v1117, 4294901760
    %1119 = vmatpush1.msra.mxu0 %v1118
    %1120 = vmatprep.subr.mxu0 0.0
    %v1121 = vand.u32 %v21, 4294901760
    %v1122 = vsub.f32 %v21, %v1121
    %v1123 = vand.u32 %v1122, 4294901760
    %1124 = vmatpush1.msra.mxu0 %v1123
    %1125 = vmatprep.subr.mxu0 0.0
    %v1126 = vand.u32 %v22, 4294901760
    %v1127 = vsub.f32 %v22, %v1126
    %v1128 = vand.u32 %v1127, 4294901760
    %1129 = vmatpush1.msra.mxu0 %v1128
    %1130 = vmatprep.subr.mxu0 0.0
    %v1131 = vand.u32 %v23, 4294901760
    %v1132 = vsub.f32 %v23, %v1131
    %v1133 = vand.u32 %v1132, 4294901760
    %1134 = vmatpush1.msra.mxu0 %v1133
    %1135 = vmatprep.subr.mxu0 0.0
    %v1136 = vand.u32 %v24, 4294901760
    %v1137 = vsub.f32 %v24, %v1136
    %v1138 = vand.u32 %v1137, 4294901760
    %1139 = vmatpush1.msra.mxu0 %v1138
    %1140 = vmatprep.subr.mxu0 0.0
    %v1141 = vand.u32 %v25, 4294901760
    %v1142 = vsub.f32 %v25, %v1141
    %v1143 = vand.u32 %v1142, 4294901760
    %1144 = vmatpush1.msra.mxu0 %v1143
    %1145 = vmatprep.subr.mxu0 0.0
    %v1146 = vand.u32 %v26, 4294901760
    %v1147 = vsub.f32 %v26, %v1146
    %v1148 = vand.u32 %v1147, 4294901760
    %1149 = vmatpush1.msra.mxu0 %v1148
    %1150 = vmatprep.subr.mxu0 0.0
    %v1151 = vand.u32 %v27, 4294901760
    %v1152 = vsub.f32 %v27, %v1151
    %v1153 = vand.u32 %v1152, 4294901760
    %1154 = vmatpush1.msra.mxu0 %v1153
    %1155 = vmatprep.subr.mxu0 0.0
    %v1156 = vand.u32 %v28, 4294901760
    %v1157 = vsub.f32 %v28, %v1156
    %v1158 = vand.u32 %v1157, 4294901760
    %1159 = vmatpush1.msra.mxu0 %v1158
    %1160 = vmatprep.subr.mxu0 0.0
    %v1161 = vand.u32 %v29, 4294901760
    %v1162 = vsub.f32 %v29, %v1161
    %v1163 = vand.u32 %v1162, 4294901760
    %1164 = vmatpush1.msra.mxu0 %v1163
    %1165 = vmatprep.subr.mxu0 0.0
    %v1166 = vand.u32 %v30, 4294901760
    %v1167 = vsub.f32 %v30, %v1166
    %v1168 = vand.u32 %v1167, 4294901760
    %1169 = vmatpush1.msra.mxu0 %v1168
    %1170 = vmatprep.subr.mxu0 0.0
    %v1171 = vand.u32 %v31, 4294901760
    %v1172 = vsub.f32 %v31, %v1171
    %v1173 = vand.u32 %v1172, 4294901760
    %1174 = vmatpush1.msra.mxu0 %v1173
    %1175 = vmatprep.subr.mxu0 0.0
    %v1176 = vand.u32 %v32, 4294901760
    %v1177 = vsub.f32 %v32, %v1176
    %v1178 = vand.u32 %v1177, 4294901760
    %1179 = vmatpush1.msra.mxu0 %v1178
    %1180 = vmatprep.subr.mxu0 0.0
    %v1181 = vand.u32 %v33, 4294901760
    %v1182 = vsub.f32 %v33, %v1181
    %v1183 = vand.u32 %v1182, 4294901760
    %1184 = vmatpush1.msra.mxu0 %v1183
    %1185 = vmatprep.subr.mxu0 0.0
    %v1186 = vand.u32 %v34, 4294901760
    %v1187 = vsub.f32 %v34, %v1186
    %v1188 = vand.u32 %v1187, 4294901760
    %1189 = vmatpush1.msra.mxu0 %v1188
    %1190 = vmatprep.subr.mxu0 0.0
    %v1191 = vand.u32 %v35, 4294901760
    %v1192 = vsub.f32 %v35, %v1191
    %v1193 = vand.u32 %v1192, 4294901760
    %1194 = vmatpush1.msra.mxu0 %v1193
    %1195 = vmatprep.subr.mxu0 0.0
    %1196 = vmatpush1.msra.mxu0 0.0
    %1197 = vmatprep.subr.mxu0 0.0
    %1198 = vmatpush1.msra.mxu0 0.0
    %1199 = vmatprep.subr.mxu0 0.0
    %1200 = vmatpush1.msra.mxu0 0.0
    %1201 = vmatprep.subr.mxu0 0.0
    %1202 = vmatpush1.msra.mxu0 0.0
    %1203 = vmatprep.subr.mxu0 0.0
    %1204 = vmatpush1.msra.mxu0 0.0
    %1205 = vmatprep.subr.mxu0 0.0
    %1206 = vmatpush1.msra.mxu0 0.0
    %1207 = vmatprep.subr.mxu0 0.0
    %1208 = vmatpush1.msra.mxu0 0.0
    %1209 = vmatprep.subr.mxu0 0.0
    %1210 = vmatpush1.msra.mxu0 0.0
    %1211 = vmatprep.subr.mxu0 0.0
    %1212 = vmatpush1.msra.mxu0 0.0
    %1213 = vmatprep.subr.mxu0 0.0
    %1214 = vmatpush1.msra.mxu0 0.0
    %1215 = vmatprep.subr.mxu0 0.0
    %1216 = vmatpush1.msra.mxu0 0.0
    %1217 = vmatprep.subr.mxu0 0.0
    %1218 = vmatpush1.msra.mxu0 0.0
    %1219 = vmatprep.subr.mxu0 0.0
    %1220 = vmatpush1.msra.mxu0 0.0
    %1221 = vmatprep.subr.mxu0 0.0
    %1222 = vmatpush1.msra.mxu0 0.0
    %1223 = vmatprep.subr.mxu0 0.0
    %1224 = vmatpush1.msra.mxu0 0.0
    %1225 = vmatprep.subr.mxu0 0.0
    %1226 = vmatpush1.msra.mxu0 0.0
    %1227 = vmatprep.mubr.f32.mxu0 0.0
    %v1228 = vand.u32 %v679, 4294901760
    %1229 = vmatmul.mubr.f32.gmra.mrb[0].mxu0 %v1228
    %v1230 = vpop.f32.mrb[0].mxu0
    %v1231 = vadd.f32 %v1112, %v1230
    %v1232 = vpop.f32.mrb[0].mxu0
    %1233 = vdwg.mxu0
    %1234 = vmatprep.subr.mxu0 0.0
    %v1235 = vand.u32 %v20, 4294901760
    %1236 = vmatpush1.msra.mxu0 %v1235
    %1237 = vmatprep.subr.mxu0 0.0
    %v1238 = vand.u32 %v21, 4294901760
    %1239 = vmatpush1.msra.mxu0 %v1238
    %1240 = vmatprep.subr.mxu0 0.0
    %v1241 = vand.u32 %v22, 4294901760
    %1242 = vmatpush1.msra.mxu0 %v1241
    %1243 = vmatprep.subr.mxu0 0.0
    %v1244 = vand.u32 %v23, 4294901760
    %1245 = vmatpush1.msra.mxu0 %v1244
    %1246 = vmatprep.subr.mxu0 0.0
    %v1247 = vand.u32 %v24, 4294901760
    %1248 = vmatpush1.msra.mxu0 %v1247
    %1249 = vmatprep.subr.mxu0 0.0
    %v1250 = vand.u32 %v25, 4294901760
    %1251 = vmatpush1.msra.mxu0 %v1250
    %1252 = vmatprep.subr.mxu0 0.0
    %v1253 = vand.u32 %v26, 4294901760
    %1254 = vmatpush1.msra.mxu0 %v1253
    %1255 = vmatprep.subr.mxu0 0.0
    %v1256 = vand.u32 %v27, 4294901760
    %1257 = vmatpush1.msra.mxu0 %v1256
    %1258 = vmatprep.subr.mxu0 0.0
    %v1259 = vand.u32 %v28, 4294901760
    %1260 = vmatpush1.msra.mxu0 %v1259
    %1261 = vmatprep.subr.mxu0 0.0
    %v1262 = vand.u32 %v29, 4294901760
    %1263 = vmatpush1.msra.mxu0 %v1262
    %1264 = vmatprep.subr.mxu0 0.0
    %v1265 = vand.u32 %v30, 4294901760
    %1266 = vmatpush1.msra.mxu0 %v1265
    %1267 = vmatprep.subr.mxu0 0.0
    %v1268 = vand.u32 %v31, 4294901760
    %1269 = vmatpush1.msra.mxu0 %v1268
    %1270 = vmatprep.subr.mxu0 0.0
    %v1271 = vand.u32 %v32, 4294901760
    %1272 = vmatpush1.msra.mxu0 %v1271
    %1273 = vmatprep.subr.mxu0 0.0
    %v1274 = vand.u32 %v33, 4294901760
    %1275 = vmatpush1.msra.mxu0 %v1274
    %1276 = vmatprep.subr.mxu0 0.0
    %v1277 = vand.u32 %v34, 4294901760
    %1278 = vmatpush1.msra.mxu0 %v1277
    %1279 = vmatprep.subr.mxu0 0.0
    %v1280 = vand.u32 %v35, 4294901760
    %1281 = vmatpush1.msra.mxu0 %v1280
    %1282 = vmatprep.subr.mxu0 0.0
    %1283 = vmatpush1.msra.mxu0 0.0
    %1284 = vmatprep.subr.mxu0 0.0
    %1285 = vmatpush1.msra.mxu0 0.0
    %1286 = vmatprep.subr.mxu0 0.0
    %1287 = vmatpush1.msra.mxu0 0.0
    %1288 = vmatprep.subr.mxu0 0.0
    %1289 = vmatpush1.msra.mxu0 0.0
    %1290 = vmatprep.subr.mxu0 0.0
    %1291 = vmatpush1.msra.mxu0 0.0
    %1292 = vmatprep.subr.mxu0 0.0
    %1293 = vmatpush1.msra.mxu0 0.0
    %1294 = vmatprep.subr.mxu0 0.0
    %1295 = vmatpush1.msra.mxu0 0.0
    %1296 = vmatprep.subr.mxu0 0.0
    %1297 = vmatpush1.msra.mxu0 0.0
    %1298 = vmatprep.subr.mxu0 0.0
    %1299 = vmatpush1.msra.mxu0 0.0
    %1300 = vmatprep.subr.mxu0 0.0
    %1301 = vmatpush1.msra.mxu0 0.0
    %1302 = vmatprep.subr.mxu0 0.0
    %1303 = vmatpush1.msra.mxu0 0.0
    %1304 = vmatprep.subr.mxu0 0.0
    %1305 = vmatpush1.msra.mxu0 0.0
    %1306 = vmatprep.subr.mxu0 0.0
    %1307 = vmatpush1.msra.mxu0 0.0
    %1308 = vmatprep.subr.mxu0 0.0
    %1309 = vmatpush1.msra.mxu0 0.0
    %1310 = vmatprep.subr.mxu0 0.0
    %1311 = vmatpush1.msra.mxu0 0.0
    %1312 = vmatprep.subr.mxu0 0.0
    %1313 = vmatpush1.msra.mxu0 0.0
    %1314 = vmatprep.mubr.f32.mxu0 0.0
    %v1315 = vand.u32 %v679, 4294901760
    %1316 = vmatmul.mubr.f32.gmra.mrb[0].mxu0 %v1315
    %v1317 = vpop.f32.mrb[0].mxu0
    %v1318 = vadd.f32 %v1231, %v1317
    %v1319 = vpop.f32.mrb[0].mxu0
    %1320 = vdwg.mxu0
    %v1321 = vmul.f32 %v1318, 0.032258064
    %v1322 = vrsqrt.pop %v1321
    %v1323 = vmul.f32 %v1321, %v1322
    %vm1324 = vcmp.eq.f32.partialorder %v1321, inf
    %v1325 = vsel %vm1324, %v1321, %v1323
    %vm1326 = vcmp.eq.f32.partialorder %v1321, 0.0
    %v1327 = vand.u32 %v1321, 2147483648
    %v1328 = vsel %vm1326, %v1327, %v1325
    %v1329 = vadd.f32 %v1328, 1e-06
    %v1330 = vrcp.pop %v1329
    %s1331 = sld [smem:[#allocation2]]
    %v1332 = vmul.f32 %v678, %v1330
    %v1333 = vstv %s1331
    %v1334 = vmul.f32 %v1333, %v1332
    %s1335 = sld [smem:[#allocation3]]
    %v1336 = vstv %s1335
    %v1337 = vadd.f32 %v1334, %v1336
    %1338 = vst [vmem:[#allocation4] sm:$0xff] %v1337
    // Predicated region
    $region18: #{encoder_forward.1} parent=1 // pred_check
      _
    $region19: #{encoder_forward.1} parent=1 // pred_check_branch
      %1340 = sbr.rel (0) target = $region21
    $region20: #{encoder_forward.1} parent=1 // pred_region
      // Predicated region
      $region22: #{encoder_forward.1} parent=20 // pred_check
        _
      $region23: #{encoder_forward.1} parent=20 // pred_check_branch
        %1342 = sbr.rel (0) target = $region25
      $region24: #{encoder_forward.1} parent=20 // pred_region
        // Predicated region
        $region26: #{encoder_forward.1} parent=24 // pred_check
          _
        $region27: #{encoder_forward.1} parent=24 // pred_check_branch
          %1344 = sbr.rel target = $region29
        $region28: #{encoder_forward.1} parent=24 // pred_region
          // Predicated region
          $region41: #{encoder_forward.1} parent=28 // pred_check
            _
          $region42: #{encoder_forward.1} parent=28 // pred_check_branch
            %1359 = sbr.rel (0) target = $region44
          $region43: #{encoder_forward.1} parent=28 // pred_region
            loop: start=0, step=1, limit=1
            $region45: #{encoder_forward.1} parent=43 // loop_pre_header
              _
            $region46: #{encoder_forward.1} parent=43 // loop_header
              %s1362 = sphi 0, %s1366
              %p1363 = scmp.ge.s32.totalorder %s1362, 1
              %s1367 = sphi [#allocation4], [#allocation4]
              %s1368 = sphi %s4, %s4
            $region47: #{encoder_forward.1} parent=43 // loop_header_branch
              %1365 = sbr.rel (%p1363) target = $region51
            $region48: #{encoder_forward.1} parent=43 // loop_body
              %v1369 = vld [vmem:[%s1367] sm:$0xf]
              %1370 = vst [vmem:[%s1368] sm:$0xf] %v1369
            $region49: #{encoder_forward.1} parent=43 // loop_footer
              %s1366 = sadd.s32 1, %s1362
            $region50: #{encoder_forward.1} parent=43 // loop_footer_branch
              %1361 = sbr.rel target = $region46
            $region51: #{encoder_forward.1} parent=43 // loop_exit
              _
          $region44: #{encoder_forward.1} parent=28 // pred_fallthru
            _
        $region29: #{encoder_forward.1} parent=24 // pred_fallthru
          _
        // Predicated region
        $region30: #{encoder_forward.1} parent=24 // pred_check
          _
        $region31: #{encoder_forward.1} parent=24 // pred_check_branch
          %1346 = sbr.rel (0) target = $region33
        $region32: #{encoder_forward.1} parent=24 // pred_region
          loop: start=0, step=1, limit=1
          $region34: #{encoder_forward.1} parent=32 // loop_pre_header
            _
          $region35: #{encoder_forward.1} parent=32 // loop_header
            %s1349 = sphi 0, %s1353
            %p1350 = scmp.ge.s32.totalorder %s1349, 1
            %s1354 = sphi [#allocation4], [#allocation4]
            %s1355 = sphi %s4, %s4
          $region36: #{encoder_forward.1} parent=32 // loop_header_branch
            %1352 = sbr.rel (%p1350) target = $region40
          $region37: #{encoder_forward.1} parent=32 // loop_body
            %v1356 = vld [vmem:[%s1354] sm:$0xf]
            %1357 = vst [vmem:[%s1355] sm:$0xf] %v1356
          $region38: #{encoder_forward.1} parent=32 // loop_footer
            %s1353 = sadd.s32 1, %s1349
          $region39: #{encoder_forward.1} parent=32 // loop_footer_branch
            %1348 = sbr.rel target = $region35
          $region40: #{encoder_forward.1} parent=32 // loop_exit
            _
        $region33: #{encoder_forward.1} parent=24 // pred_fallthru
          _
      $region25: #{encoder_forward.1} parent=20 // pred_fallthru
        _
      %1371 = vnop
    $region21: #{encoder_forward.1} parent=1 // pred_fallthru
      _
    // Predicated region
    $region52: #{encoder_forward.1} parent=1 // pred_check
      _
    $region53: #{encoder_forward.1} parent=1 // pred_check_branch
      %1373 = sbr.rel (0) target = $region55
    $region54: #{encoder_forward.1} parent=1 // pred_region
      _
    $region55: #{encoder_forward.1} parent=1 // pred_fallthru
      _

</llo_original>
